<compile_context>
chip_gen: v6e
topology: v6e:2x2x1
jax: 0.10.0
libtpu: 0.0.40
codegen_flags: <defaults>
</compile_context>

<pallas_src>
import jax
import jax.numpy as jnp
import numpy as np
from jax.experimental import pallas as pl
from jax.experimental.pallas import tpu as pltpu

EPS = 1e-5  # PyTorch LayerNorm default eps

# Contract the last dim of both operands: (8, H) x (S, H) -> (8, S).
_TRANS_B_DIMS = (((1,), (1,)), ((), ()))


def _act_halting_kernel(x_ref, w_ref, const_ref, out_ref):
    # x_ref:     (S, H)  one batch, natural layout (hidden on lanes).
    # w_ref:     (8, H)  folded weights: [tap@s-1, tap@s, tap@s+1, global, ones, 0, 0, 0].
    # const_ref: (1, S)  per-position constant (edge-gated LN-bias tap terms + biases).
    # out_ref:   (1, S)  halting probability for this batch (lane-dense store).
    seq, hid = x_ref.shape
    x = x_ref[...].astype(jnp.float32)
    w = w_ref[...]

    # All channel reductions (3 conv taps + global path + sum(x)) in one MXU matmul,
    # already in "sequence on lanes" orientation.  Second matmul gives sum(x^2).
    d = jax.lax.dot_general(w, x, _TRANS_B_DIMS,
                            preferred_element_type=jnp.float32)          # (8, S)
    d2 = jax.lax.dot_general(w, x * x, _TRANS_B_DIMS,
                             preferred_element_type=jnp.float32)         # (8, S)

    # LayerNorm statistics per sequence position (f32, biased variance).
    s1 = d[4:5, :]                                                       # sum_h x
    s2 = d2[4:5, :]                                                      # sum_h x^2
    mu = s1 * (1.0 / hid)
    var = jnp.maximum(s2 * (1.0 / hid) - mu * mu, 0.0)
    r = jax.lax.rsqrt(var + EPS)                                         # (1, S)

    row_m1 = d[0:1, :] * r      # conv tap that reads position s-1 (evaluated at its own s)
    row_0 = d[1:2, :] * r       # center tap
    row_p1 = d[2:3, :] * r      # conv tap that reads position s+1
    row_g = d[3:4, :] * r       # global path (averaged over S below)

    # +-1 sequence shifts realised on the reduced (1, S) rows; zero the wrapped edge lane.
    idx = jax.lax.broadcasted_iota(jnp.int32, (1, seq), 1)
    left = jnp.where(idx == 0, 0.0, jnp.roll(row_m1, 1, axis=1))          # row_m1[s-1]
    right = jnp.where(idx == seq - 1, 0.0, jnp.roll(row_p1, -1, axis=1))  # row_p1[s+1]

    g = jnp.sum(row_g, axis=1, keepdims=True) * (1.0 / seq)              # (1, 1) global part

    logit = left + row_0 + right + g + const_ref[...]
    out_ref[...] = jax.nn.sigmoid(logit).astype(out_ref.dtype)


def _fold_params(params):
    gl, bl_ln = params["ln_local_w"], params["ln_local_b"]        # (H,), (H,)
    wl, bl_cv = params["conv_local_w"], params["conv_local_b"]    # (H, H, 3), (H,)
    ul, cl = params["fc_local_w"], params["fc_local_b"]           # (1, H), (1,)
    gg, bg_ln = params["ln_global_w"], params["ln_global_b"]      # (H,), (H,)
    wg, bg_cv = params["conv_global_w"], params["conv_global_b"]  # (H, H, 1), (H,)
    ug, cg = params["fc_global_w"], params["fc_global_b"]         # (1, H), (1,)
    H = gl.shape[0]

    # Local path: Linear(H->1) o Conv1d(H->H, 3) == three (H,) tap vectors.
    v = jnp.einsum("o,oik->ki", ul[0], wl)                        # (3, H)
    v_scaled = v * gl[None, :]                                    # fold LN weight
    v_cent = v_scaled - jnp.mean(v_scaled, axis=1, keepdims=True)  # fold LN mean-subtract

    # Global path: Linear(H->1) o Conv1d(H->H, 1) == one (H,) vector.
    u = jnp.einsum("o,oi->i", ug[0], wg[:, :, 0])                 # (H,)
    u_scaled = u * gg
    u_cent = u_scaled - jnp.mean(u_scaled)

    w8 = jnp.zeros((8, H), jnp.float32)
    w8 = w8.at[0:3, :].set(v_cent.astype(jnp.float32))
    w8 = w8.at[3, :].set(u_cent.astype(jnp.float32))
    w8 = w8.at[4, :].set(1.0)                                     # ones row -> sum_h(x)

    c_taps = v @ bl_ln                                            # (3,) LN-bias per tap
    offset = (jnp.dot(ul[0], bl_cv) + cl[0]                       # local conv + fc biases
              + jnp.dot(u, bg_ln)                                 # global LN bias term
              + jnp.dot(ug[0], bg_cv) + cg[0])                    # global conv + fc biases
    return w8, c_taps, offset


@jax.jit
def act_linear_halting_forward(x, params):
    """x: (B, S, H) -> halting probability (B, S, 1), matching the PyTorch module."""
    B, S, H = x.shape
    w8, c_taps, offset = _fold_params(params)

    # Per-position constant row: center tap + edge-gated +-1-tap LN-bias terms + biases.
    s_idx = jnp.arange(S)
    const_row = (offset + c_taps[1]
                 + jnp.where(s_idx > 0, c_taps[0], 0.0)
                 + jnp.where(s_idx < S - 1, c_taps[2], 0.0)
                 ).astype(jnp.float32)[None, :]                   # (1, S)

    probs = pl.pallas_call(
        _act_halting_kernel,
        out_shape=jax.ShapeDtypeStruct((B, 1, S), x.dtype),
        grid=(B,),
        in_specs=[
            pl.BlockSpec((None, S, H), lambda b: (b, 0, 0)),      # one batch slab (S, H)
            pl.BlockSpec((8, H), lambda b: (0, 0)),               # folded weights
            pl.BlockSpec((1, S), lambda b: (0, 0)),               # constant row
        ],
        out_specs=pl.BlockSpec((None, 1, S), lambda b: (b, 0, 0)),  # lane-dense (1, S)
        compiler_params=pltpu.CompilerParams(
            dimension_semantics=("parallel",)),
    )(x, w8, const_row)
    # (B,1,S) -> (B,S,1): swaps only size-1 dims, i.e. a free reshape.
    return jnp.transpose(probs, (0, 2, 1))


def reference(x, params):
    # Pure-JAX mirror of the PyTorch forward (unfolded weights).
    gl, bl_ln = params["ln_local_w"], params["ln_local_b"]
    wl, bl_cv = params["conv_local_w"], params["conv_local_b"]
    ul, cl = params["fc_local_w"], params["fc_local_b"]
    gg, bg_ln = params["ln_global_w"], params["ln_global_b"]
    wg, bg_cv = params["conv_global_w"], params["conv_global_b"]
    ug, cg = params["fc_global_w"], params["fc_global_b"]
    B, S, H = x.shape

    def layer_norm(z, w, b):
        m = jnp.mean(z, axis=-1, keepdims=True)
        v = jnp.mean((z - m) ** 2, axis=-1, keepdims=True)
        return (z - m) / jnp.sqrt(v + EPS) * w + b

    feat_l = layer_norm(x, gl, bl_ln)                             # (B, S, H)
    fp = jnp.pad(feat_l, ((0, 0), (1, 1), (0, 0)))
    conv_l = sum(jnp.einsum("bsi,oi->bso", fp[:, k:k + S, :], wl[:, :, k])
                 for k in range(3)) + bl_cv                       # (B, S, H)
    logit_l = jnp.einsum("bso,o->bs", conv_l, ul[0]) + cl[0]      # (B, S)

    feat_g = layer_norm(x, gg, bg_ln)
    conv_g = jnp.einsum("bsi,oi->bso", feat_g, wg[:, :, 0]) + bg_cv
    gm = jnp.mean(conv_g, axis=1)                                 # (B, H)
    logit_g = jnp.einsum("bo,o->b", gm, ug[0]) + cg[0]            # (B,)

    prob = jax.nn.sigmoid(logit_l + logit_g[:, None])
    return prob[:, :, None]                                       # (B, S, 1)


if __name__ == "__main__":
    B, S, H = 2, 8, 32
    key = jax.random.PRNGKey(0)
    ks = jax.random.split(key, 12)
    x = jax.random.normal(ks[0], (B, S, H), jnp.float32)

    def unif(k, shape, scale):
        return jax.random.uniform(k, shape, jnp.float32, -1.0, 1.0) * scale

    params = dict(
        ln_local_w=1.0 + 0.1 * jax.random.normal(ks[1], (H,), jnp.float32),
        ln_local_b=0.1 * jax.random.normal(ks[2], (H,), jnp.float32),
        conv_local_w=unif(ks[3], (H, H, 3), 1.0 / np.sqrt(3 * H)),
        conv_local_b=jnp.full((H,), -3.0, jnp.float32),   # module fills local conv bias = -3.0
        fc_local_w=unif(ks[4], (1, H), 1.0 / np.sqrt(H)),
        fc_local_b=unif(ks[5], (1,), 1.0 / np.sqrt(H)),
        ln_global_w=1.0 + 0.1 * jax.random.normal(ks[6], (H,), jnp.float32),
        ln_global_b=0.1 * jax.random.normal(ks[7], (H,), jnp.float32),
        conv_global_w=unif(ks[8], (H, H, 1), 1.0 / np.sqrt(H)),
        conv_global_b=unif(ks[9], (H,), 1.0 / np.sqrt(H)),
        fc_global_w=unif(ks[10], (1, H), 1.0 / np.sqrt(H)),
        fc_global_b=unif(ks[11], (1,), 1.0 / np.sqrt(H)),
    )

    out = act_linear_halting_forward(x, params)
    out = jax.block_until_ready(out)

    ref = reference(x, params)
    np.testing.assert_allclose(np.asarray(out), np.asarray(ref), rtol=2e-5, atol=2e-5)
    assert out.shape == (B, S, 1)
    print("KERNEL_OK")
</pallas_src>

<mosaic_0001>
module attributes {stable_mosaic.version = 11 : i64} {
  func.func @_act_halting_kernel(%arg0: i32, %arg1: memref<1x8x32xf32, #tpu.memory_space<vmem>>, %arg2: memref<8x32xf32, #tpu.memory_space<vmem>>, %arg3: memref<1x8xf32, #tpu.memory_space<vmem>>, %arg4: memref<1x1x8xf32, #tpu.memory_space<vmem>>) attributes {dimension_semantics = [#tpu.dimension_semantics<parallel>], iteration_bounds = array<i64: 2>, scalar_prefetch = 0 : i64, scratch_operands = 0 : i64, tpu.core_type = #tpu.core_type<tc>, window_params = [{transform_indices = @transform_0, window_bounds = array<i64: 1, 8, 32>}, {pipeline_mode = #tpu.pipeline_mode<synchronous>, transform_indices = @transform_1, window_bounds = array<i64: 8, 32>}, {pipeline_mode = #tpu.pipeline_mode<synchronous>, transform_indices = @transform_2, window_bounds = array<i64: 1, 8>}, {transform_indices = @transform_3, window_bounds = array<i64: 1, 1, 8>}]} {
    %c0 = arith.constant 0 : index
    %c0_0 = arith.constant 0 : index
    %c0_1 = arith.constant 0 : index
    %0 = vector.load %arg1[%c0, %c0_0, %c0_1] : memref<1x8x32xf32, #tpu.memory_space<vmem>>, vector<1x8x32xf32>
    %1 = vector.shape_cast %0 : vector<1x8x32xf32> to vector<8x32xf32>
    %c0_2 = arith.constant 0 : index
    %c0_3 = arith.constant 0 : index
    %2 = vector.load %arg2[%c0_2, %c0_3] : memref<8x32xf32, #tpu.memory_space<vmem>>, vector<8x32xf32>
    %cst = arith.constant dense<0.000000e+00> : vector<8x8xf32>
    %3 = tpu.matmul %2, %1, %cst {dimension_numbers = #tpu.dot_dimension_numbers<[1], [1], [0], [0], [0, 0, 1, 0], [], []>} : vector<8x32xf32>, vector<8x32xf32>, vector<8x8xf32> -> vector<8x8xf32>
    %4 = arith.mulf %1, %1 : vector<8x32xf32>
    %cst_4 = arith.constant dense<0.000000e+00> : vector<8x8xf32>
    %5 = tpu.matmul %2, %4, %cst_4 {dimension_numbers = #tpu.dot_dimension_numbers<[1], [1], [0], [0], [0, 0, 1, 0], [], []>} : vector<8x32xf32>, vector<8x32xf32>, vector<8x8xf32> -> vector<8x8xf32>
    %6 = vector.extract_strided_slice %3 {offsets = [4, 0], sizes = [1, 8], strides = [1, 1]} : vector<8x8xf32> to vector<1x8xf32>
    %7 = vector.extract_strided_slice %5 {offsets = [4, 0], sizes = [1, 8], strides = [1, 1]} : vector<8x8xf32> to vector<1x8xf32>
    %cst_5 = arith.constant 3.125000e-02 : f32
    %8 = vector.broadcast %cst_5 : f32 to vector<1x8xf32>
    %9 = arith.mulf %6, %8 : vector<1x8xf32>
    %cst_6 = arith.constant 3.125000e-02 : f32
    %10 = vector.broadcast %cst_6 : f32 to vector<1x8xf32>
    %11 = arith.mulf %7, %10 : vector<1x8xf32>
    %12 = arith.mulf %9, %9 : vector<1x8xf32>
    %13 = arith.subf %11, %12 : vector<1x8xf32>
    %cst_7 = arith.constant 0.000000e+00 : f32
    %14 = vector.broadcast %cst_7 : f32 to vector<1x8xf32>
    %15 = arith.maximumf %13, %14 : vector<1x8xf32>
    %cst_8 = arith.constant 9.99999974E-6 : f32
    %16 = vector.broadcast %cst_8 : f32 to vector<1x8xf32>
    %17 = arith.addf %15, %16 : vector<1x8xf32>
    %18 = math.rsqrt %17 : vector<1x8xf32>
    %19 = vector.extract_strided_slice %3 {offsets = [0, 0], sizes = [1, 8], strides = [1, 1]} : vector<8x8xf32> to vector<1x8xf32>
    %20 = arith.mulf %19, %18 : vector<1x8xf32>
    %21 = vector.extract_strided_slice %3 {offsets = [1, 0], sizes = [1, 8], strides = [1, 1]} : vector<8x8xf32> to vector<1x8xf32>
    %22 = arith.mulf %21, %18 : vector<1x8xf32>
    %23 = vector.extract_strided_slice %3 {offsets = [2, 0], sizes = [1, 8], strides = [1, 1]} : vector<8x8xf32> to vector<1x8xf32>
    %24 = arith.mulf %23, %18 : vector<1x8xf32>
    %25 = vector.extract_strided_slice %3 {offsets = [3, 0], sizes = [1, 8], strides = [1, 1]} : vector<8x8xf32> to vector<1x8xf32>
    %26 = arith.mulf %25, %18 : vector<1x8xf32>
    %27 = tpu.iota {dimensions = array<i32: 1>} : vector<1x8xi32>
    %c0_i32 = arith.constant 0 : i32
    %28 = vector.broadcast %c0_i32 : i32 to vector<1x8xi32>
    %29 = arith.cmpi eq, %27, %28 : vector<1x8xi32>
    %30 = vector.extract_strided_slice %20 {offsets = [0, 7], sizes = [1, 1], strides = [1, 1]} : vector<1x8xf32> to vector<1x1xf32>
    %31 = vector.extract_strided_slice %20 {offsets = [0, 0], sizes = [1, 7], strides = [1, 1]} : vector<1x8xf32> to vector<1x7xf32>
    %32 = tpu.concatenate %30, %31 in 1 : vector<1x1xf32>, vector<1x7xf32> -> vector<1x8xf32>
    %cst_9 = arith.constant 0.000000e+00 : f32
    %33 = vector.broadcast %cst_9 : f32 to vector<1x8xf32>
    %34 = arith.select %29, %33, %32 : vector<1x8xi1>, vector<1x8xf32>
    %c7_i32 = arith.constant 7 : i32
    %35 = vector.broadcast %c7_i32 : i32 to vector<1x8xi32>
    %36 = arith.cmpi eq, %27, %35 : vector<1x8xi32>
    %37 = vector.extract_strided_slice %24 {offsets = [0, 1], sizes = [1, 7], strides = [1, 1]} : vector<1x8xf32> to vector<1x7xf32>
    %38 = vector.extract_strided_slice %24 {offsets = [0, 0], sizes = [1, 1], strides = [1, 1]} : vector<1x8xf32> to vector<1x1xf32>
    %39 = tpu.concatenate %37, %38 in 1 : vector<1x7xf32>, vector<1x1xf32> -> vector<1x8xf32>
    %cst_10 = arith.constant 0.000000e+00 : f32
    %40 = vector.broadcast %cst_10 : f32 to vector<1x8xf32>
    %41 = arith.select %36, %40, %39 : vector<1x8xi1>, vector<1x8xf32>
    %cst_11 = arith.constant dense<0.000000e+00> : vector<1xf32>
    %42 = vector.multi_reduction <add>, %26, %cst_11 [1] : vector<1x8xf32> to vector<1xf32>
    %43 = vector.shape_cast %42 : vector<1xf32> to vector<1x1xf32>
    %cst_12 = arith.constant 1.250000e-01 : f32
    %44 = vector.broadcast %cst_12 : f32 to vector<1x1xf32>
    %45 = arith.mulf %43, %44 : vector<1x1xf32>
    %46 = arith.addf %34, %22 : vector<1x8xf32>
    %47 = arith.addf %46, %41 : vector<1x8xf32>
    %48 = vector.broadcast %45 : vector<1x1xf32> to vector<1x8xf32>
    %49 = arith.addf %47, %48 : vector<1x8xf32>
    %c0_13 = arith.constant 0 : index
    %c0_14 = arith.constant 0 : index
    %50 = vector.load %arg3[%c0_13, %c0_14] : memref<1x8xf32, #tpu.memory_space<vmem>>, vector<1x8xf32>
    %51 = arith.addf %49, %50 : vector<1x8xf32>
    %52 = arith.negf %51 : vector<1x8xf32>
    %53 = math.exp %52 : vector<1x8xf32>
    %cst_15 = arith.constant 1.000000e+00 : f32
    %54 = vector.broadcast %cst_15 : f32 to vector<1x8xf32>
    %55 = arith.addf %54, %53 : vector<1x8xf32>
    %56 = arith.divf %54, %55 : vector<1x8xf32>
    %c0_16 = arith.constant 0 : index
    %c0_17 = arith.constant 0 : index
    %c0_18 = arith.constant 0 : index
    %57 = vector.load %arg4[%c0_16, %c0_17, %c0_18] : memref<1x1x8xf32, #tpu.memory_space<vmem>>, vector<1x1x8xf32>
    %58 = vector.shape_cast %57 : vector<1x1x8xf32> to vector<1x8xf32>
    %59 = vector.shape_cast %56 : vector<1x8xf32> to vector<1x1x8xf32>
    tpu.vector_store %arg4[%c0_16, %c0_17, %c0_18], %59 {strides = array<i32>} : memref<1x1x8xf32, #tpu.memory_space<vmem>>, vector<1x1x8xf32>,
    return
  }
  func.func @transform_0(%arg0: i32) -> (i32, i32, i32) {
    %c0_i32 = arith.constant 0 : i32
    %c0_i32_0 = arith.constant 0 : i32
    %c0_i32_1 = arith.constant 0 : i32
    return %arg0, %c0_i32, %c0_i32_0 : i32, i32, i32
  }
  func.func @transform_1(%arg0: i32) -> (i32, i32) {
    %c0_i32 = arith.constant 0 : i32
    %c0_i32_0 = arith.constant 0 : i32
    %c0_i32_1 = arith.constant 0 : i32
    return %c0_i32, %c0_i32_0 : i32, i32
  }
  func.func @transform_2(%arg0: i32) -> (i32, i32) {
    %c0_i32 = arith.constant 0 : i32
    %c0_i32_0 = arith.constant 0 : i32
    %c0_i32_1 = arith.constant 0 : i32
    return %c0_i32, %c0_i32_0 : i32, i32
  }
  func.func @transform_3(%arg0: i32) -> (i32, i32, i32) {
    %c0_i32 = arith.constant 0 : i32
    %c0_i32_0 = arith.constant 0 : i32
    %c0_i32_1 = arith.constant 0 : i32
    return %arg0, %c0_i32, %c0_i32_0 : i32, i32, i32
  }
}

</mosaic_0001>

<llo_original>
// kernel: act_linear_halting_forward.1
$region0: #{act_linear_halting_forward.1}
  #allocation0 [shape = 'u32[]', space=smem, size = 0x4, offset = 0x4, fixed_abs, tag = 'smem constant byte address 0x4 - core index']
  #allocation1 [shape = 'u32[144,128]{1,0:T(1,128)}', space=vmem, size = 0x12000, scoped, tag = 'internal scratch']
  %s0 = inlined_call_operand.vmem [shape: f32[2,8,32], index: 0, kind: input, shape index: {}]
  %s1 = inlined_call_operand.vmem [shape: f32[8,32], index: 1, kind: input, shape index: {}]
  %s2 = inlined_call_operand.vmem [shape: f32[1,8], index: 2, kind: input, shape index: {}]
  %s3 = inlined_call_operand.hbm [shape: f32[2,1,8], index: 3, kind: output, shape index: {}]
  %s4 = sld [smem:[#allocation0]]
  $region45: #{act_linear_halting_forward.1} parent=0
    _
  %s6 = ssub.s32 1, %s4
  %s7 = scalar_select 0, %s6, %s4
  $region1: #{act_linear_halting_forward.1} parent=0
    #allocation2 [shape = 'u8[1024]{0}', space=vmem, size = 0x400, scoped, tag = 'output window, operand 0']
    #allocation3 [shape = 's32[2]{0}', space=sflag, size = 0x8, scoped, tag = 'scoped memory for act_linear_halting_forward.1']
    %8 = vsyncpa [#allocation3], 0
    %s9 = scalar_lea.sflag [#allocation3], 1
    %10 = vsyncpa %s9, 0
    loop: start=0, step=1, limit=4
    $region2: #{act_linear_halting_forward.1} parent=1 // loop_pre_header
      _
    $region3: #{act_linear_halting_forward.1} parent=1 // loop_header
      %s12 = sphi 0, %s16
      %p13 = scmp.ge.s32.totalorder %s12, 4
      %s22 = sphi 0, %s24
      %s25 = sphi 0, %s22
      %s26 = sphi 0, %s25
      %s42 = sphi 0, %s26
      %s46 = sphi 0, %s46
      %s48 = sphi 0, %s46
      %s49 = sphi 0, %s48
      %s63 = sphi 0, %s49
      %s67 = sphi 0, %s67
      %s69 = sphi 0, %s67
      %s70 = sphi 0, %s69
      %s84 = sphi 0, %s70
      %s90 = sphi 0, %s92
      %s93 = sphi 0, %s90
      %s94 = sphi 0, %s93
      %s110 = sphi 0, %s94
    $region4: #{act_linear_halting_forward.1} parent=1 // loop_header_branch
      %15 = sbr.rel (%p13) target = $region8
    $region5: #{act_linear_halting_forward.1} parent=1 // loop_body
      %s17 = ssub.s32 %s12, 1
      %s18 = ssub.s32 %s12, 2
      %s19 = sadd.s32 %s12, 1
      %s20 = ssub.s32 %s12, %s19
      %p21 = scmp.eq.s32.totalorder %s20, 0
      %s23 = sadd.s32 %s22, 1
      %s24 = scalar_select %p21, %s22, %s23
      %p27 = pneg %p21
      %p28 = scmp.eq.s32.totalorder %s12, 1
      %p29 = por %p27, %p28
      %p30 = scmp.ne.s32.totalorder %s22, %s25
      %p31 = scmp.eq.s32.totalorder %s12, 0
      %p32 = por %p30, %p31
      %p33 = scmp.ne.s32.totalorder %s22, %s25
      %p34 = scmp.eq.s32.totalorder %s17, 1
      %p35 = por %p33, %p34
      %p36 = scmp.ne.s32.totalorder %s25, %s26
      %p37 = scmp.eq.s32.totalorder %s17, 0
      %p38 = por %p36, %p37
      %p39 = scmp.ne.s32.totalorder %s25, %s26
      %p40 = scmp.eq.s32.totalorder %s18, 1
      %p41 = por %p39, %p40
      %p43 = scmp.ne.s32.totalorder %s26, %s42
      %p44 = scmp.eq.s32.totalorder %s18, 0
      %p45 = por %p43, %p44
      %s47 = sadd.s32 %s46, 1
      %p50 = scmp.eq.s32.totalorder %s12, 1
      %p51 = scmp.ne.s32.totalorder %s46, %s48
      %p52 = scmp.eq.s32.totalorder %s12, 0
      %p53 = por %p51, %p52
      %p54 = scmp.ne.s32.totalorder %s46, %s48
      %p55 = scmp.eq.s32.totalorder %s17, 1
      %p56 = por %p54, %p55
      %p57 = scmp.ne.s32.totalorder %s48, %s49
      %p58 = scmp.eq.s32.totalorder %s17, 0
      %p59 = por %p57, %p58
      %p60 = scmp.ne.s32.totalorder %s48, %s49
      %p61 = scmp.eq.s32.totalorder %s18, 1
      %p62 = por %p60, %p61
      %p64 = scmp.ne.s32.totalorder %s49, %s63
      %p65 = scmp.eq.s32.totalorder %s18, 0
      %p66 = por %p64, %p65
      %s68 = sadd.s32 %s67, 1
      %p71 = scmp.eq.s32.totalorder %s12, 1
      %p72 = scmp.ne.s32.totalorder %s67, %s69
      %p73 = scmp.eq.s32.totalorder %s12, 0
      %p74 = por %p72, %p73
      %p75 = scmp.ne.s32.totalorder %s67, %s69
      %p76 = scmp.eq.s32.totalorder %s17, 1
      %p77 = por %p75, %p76
      %p78 = scmp.ne.s32.totalorder %s69, %s70
      %p79 = scmp.eq.s32.totalorder %s17, 0
      %p80 = por %p78, %p79
      %p81 = scmp.ne.s32.totalorder %s69, %s70
      %p82 = scmp.eq.s32.totalorder %s18, 1
      %p83 = por %p81, %p82
      %p85 = scmp.ne.s32.totalorder %s70, %s84
      %p86 = scmp.eq.s32.totalorder %s18, 0
      %p87 = por %p85, %p86
      %s88 = ssub.s32 %s12, %s19
      %p89 = scmp.eq.s32.totalorder %s88, 0
      %s91 = sadd.s32 %s90, 1
      %s92 = scalar_select %p89, %s90, %s91
      %p95 = pneg %p89
      %p96 = scmp.eq.s32.totalorder %s12, 1
      %p97 = por %p95, %p96
      %p98 = scmp.ne.s32.totalorder %s90, %s93
      %p99 = scmp.eq.s32.totalorder %s12, 0
      %p100 = por %p98, %p99
      %p101 = scmp.ne.s32.totalorder %s90, %s93
      %p102 = scmp.eq.s32.totalorder %s17, 1
      %p103 = por %p101, %p102
      %p104 = scmp.ne.s32.totalorder %s93, %s94
      %p105 = scmp.eq.s32.totalorder %s17, 0
      %p106 = por %p104, %p105
      %p107 = scmp.ne.s32.totalorder %s93, %s94
      %p108 = scmp.eq.s32.totalorder %s18, 1
      %p109 = por %p107, %p108
      %p111 = scmp.ne.s32.totalorder %s94, %s110
      %p112 = scmp.eq.s32.totalorder %s18, 0
      %p113 = por %p111, %p112
      %p114 = scmp.le.s32.totalorder 1, %s12
      %p115 = scmp.lt.s32.totalorder %s12, 3
      %p116 = pnand %p114, %p115
      %p117 = pneg %p116
      // Predicated region
      $region9: #{act_linear_halting_forward.1} parent=5 // pred_check
        _
      $region10: #{act_linear_halting_forward.1} parent=5 // pred_check_branch
        %119 = sbr.rel (%p116) target = $region12
      $region11: #{act_linear_halting_forward.1} parent=5 // pred_region
        %s120 = ssub.s32 %s12, 1
        // Predicated region
        $region13: #{act_linear_halting_forward.1} parent=11 // pred_check
          %p121 = pneg %p59
        $region14: #{act_linear_halting_forward.1} parent=11 // pred_check_branch
          %123 = sbr.rel (%p121) target = $region16
        $region15: #{act_linear_halting_forward.1} parent=11 // pred_region
          _
        $region16: #{act_linear_halting_forward.1} parent=11 // pred_fallthru
          _
        // Predicated region
        $region17: #{act_linear_halting_forward.1} parent=11 // pred_check
          %p124 = pneg %p80
        $region18: #{act_linear_halting_forward.1} parent=11 // pred_check_branch
          %126 = sbr.rel (%p124) target = $region20
        $region19: #{act_linear_halting_forward.1} parent=11 // pred_region
          _
        $region20: #{act_linear_halting_forward.1} parent=11 // pred_fallthru
          _
      $region12: #{act_linear_halting_forward.1} parent=5 // pred_fallthru
        _
      %p127 = scmp.lt.s32.totalorder %s12, 2
      // Predicated region
      $region21: #{act_linear_halting_forward.1} parent=5 // pred_check
        %p128 = pneg %p127
      $region22: #{act_linear_halting_forward.1} parent=5 // pred_check_branch
        %130 = sbr.rel (%p128) target = $region24
      $region23: #{act_linear_halting_forward.1} parent=5 // pred_region
        // Predicated region
        $region25: #{act_linear_halting_forward.1} parent=23 // pred_check
          %p131 = pneg %p32
        $region26: #{act_linear_halting_forward.1} parent=23 // pred_check_branch
          %133 = sbr.rel (%p131) target = $region28
        $region27: #{act_linear_halting_forward.1} parent=23 // pred_region
          %p134 = scmp.lt.s32.totalorder %s12, 1
          %s135 = scalar_select %p134, %s12, 1
          %s136 = smul.addr %s135, 8
          %s137 = scalar_lea.vmem %s0, %s136
        $region28: #{act_linear_halting_forward.1} parent=23 // pred_fallthru
          _
      $region24: #{act_linear_halting_forward.1} parent=5 // pred_fallthru
        _
      %p138 = scmp.le.s32.totalorder 1, %s12
      %p139 = scmp.lt.s32.totalorder %s12, 3
      %p140 = pnand %p138, %p139
      %p141 = pneg %p140
      // Predicated region
      $region29: #{act_linear_halting_forward.1} parent=5 // pred_check
        _
      $region30: #{act_linear_halting_forward.1} parent=5 // pred_check_branch
        %143 = sbr.rel (%p140) target = $region32
      $region31: #{act_linear_halting_forward.1} parent=5 // pred_region
        %s144 = ssub.s32 %s12, 1
        %p145 = scmp.lt.s32.totalorder %s17, 1
        %s146 = scalar_select %p145, %s17, 1
        %s147 = smul.addr %s146, 8
        %s148 = scalar_lea.vmem %s0, %s147
        %p149 = pneg %p38
        %p150 = pneg %p35
        %p151 = pneg %p59
        %p152 = pneg %p56
        %p153 = pneg %p80
        %p154 = pneg %p77
        %p155 = pneg %p106
        %p156 = pneg %p103
        %s157 = sand.u32 %s93, 1
        %s158 = scalar_lea.sflag [#allocation3], %s157
        %s159 = sand.u32 %s93, 1
        %s160 = scalar_lea.vmem [#allocation2], %s159
        %p161 = scmp.lt.s32.totalorder %s17, 1
        %s162 = scalar_select %p161, %s17, 1
        %s163 = smul.addr %s162, 8
        %s164 = scalar_lea.vmem %s0, %s163
        %v165 = vld [vmem:[%s164] sm:$0xff]
        %v166 = vld [vmem:[%s1] sm:$0xff]
        %vm167 = vcmask 261120
        %v169 = vsel %vm167, %v166, 0
        %v172 = vsel %vm167, %v165, 0
        %174 = vmatprep.subr.mxu0 0.0
        %175 = vmatpush1.xpose.msra.mxu0 0.0
        %176 = vmatprep.subr.mxu0 0.0
        %177 = vmatpush1.xpose.msra.mxu0 0.0
        %178 = vmatprep.subr.mxu0 0.0
        %179 = vmatpush1.xpose.msra.mxu0 0.0
        %180 = vmatprep.subr.mxu0 0.0
        %181 = vmatpush1.xpose.msra.mxu0 0.0
        %182 = vmatprep.subr.mxu0 0.0
        %183 = vmatpush1.xpose.msra.mxu0 0.0
        %184 = vmatprep.subr.mxu0 0.0
        %185 = vmatpush1.xpose.msra.mxu0 0.0
        %186 = vmatprep.subr.mxu0 0.0
        %187 = vmatpush1.xpose.msra.mxu0 0.0
        %188 = vmatprep.subr.mxu0 0.0
        %189 = vmatpush1.xpose.msra.mxu0 0.0
        %190 = vmatprep.subr.mxu0 0.0
        %191 = vmatpush1.xpose.msra.mxu0 0.0
        %192 = vmatprep.subr.mxu0 0.0
        %193 = vmatpush1.xpose.msra.mxu0 0.0
        %194 = vmatprep.subr.mxu0 0.0
        %195 = vmatpush1.xpose.msra.mxu0 0.0
        %196 = vmatprep.subr.mxu0 0.0
        %197 = vmatpush1.xpose.msra.mxu0 0.0
        %198 = vmatprep.subr.mxu0 0.0
        %199 = vmatpush1.xpose.msra.mxu0 0.0
        %200 = vmatprep.subr.mxu0 0.0
        %201 = vmatpush1.xpose.msra.mxu0 0.0
        %202 = vmatprep.subr.mxu0 0.0
        %203 = vmatpush1.xpose.msra.mxu0 0.0
        %204 = vmatprep.subr.mxu0 0.0
        %205 = vmatpush1.xpose.msra.mxu0 %v172
        %206 = vmatprep.subr.mxu0 0.0
        %207 = vmatpush2.xpose.msra.mxu0 0.0
        %208 = vmatprep.subr.mxu0 0.0
        %209 = vmatpush2.xpose.msra.mxu0 0.0
        %210 = vmatprep.subr.mxu0 0.0
        %211 = vmatpush2.xpose.msra.mxu0 0.0
        %212 = vmatprep.subr.mxu0 0.0
        %213 = vmatpush2.xpose.msra.mxu0 0.0
        %214 = vmatprep.subr.mxu0 0.0
        %215 = vmatpush2.xpose.msra.mxu0 0.0
        %216 = vmatprep.subr.mxu0 0.0
        %217 = vmatpush2.xpose.msra.mxu0 0.0
        %218 = vmatprep.subr.mxu0 0.0
        %219 = vmatpush2.xpose.msra.mxu0 0.0
        %220 = vmatprep.subr.mxu0 0.0
        %221 = vmatpush2.xpose.msra.mxu0 0.0
        %222 = vmatprep.subr.mxu0 0.0
        %223 = vmatpush2.xpose.msra.mxu0 0.0
        %224 = vmatprep.subr.mxu0 0.0
        %225 = vmatpush2.xpose.msra.mxu0 0.0
        %226 = vmatprep.subr.mxu0 0.0
        %227 = vmatpush2.xpose.msra.mxu0 0.0
        %228 = vmatprep.subr.mxu0 0.0
        %229 = vmatpush2.xpose.msra.mxu0 0.0
        %230 = vmatprep.subr.mxu0 0.0
        %231 = vmatpush2.xpose.msra.mxu0 0.0
        %232 = vmatprep.subr.mxu0 0.0
        %233 = vmatpush2.xpose.msra.mxu0 0.0
        %234 = vmatprep.subr.mxu0 0.0
        %235 = vmatpush2.xpose.msra.mxu0 0.0
        %236 = vmatprep.subr.mxu0 0.0
        %237 = vmatpush2.xpose.msra.mxu0 0.0
        %238 = vmatprep.mubr.f32.mxu0 0.0
        %239 = vmatmul.mubr.f32.gmra.mxu0 %v169
        %v240 = vpop.f32.mrf.mxu0
        %v241 = vadd.f32 0.0, %v240
        %v242 = vpop.f32.mrf.mxu0
        %243 = vdwg.mxu0
        %v244 = vmul.f32 %v165, %v165
        %v246 = vsel %vm167, %v244, 0
        %248 = vmatprep.subr.mxu0 0.0
        %249 = vmatpush1.xpose.msra.mxu0 0.0
        %250 = vmatprep.subr.mxu0 0.0
        %251 = vmatpush1.xpose.msra.mxu0 0.0
        %252 = vmatprep.subr.mxu0 0.0
        %253 = vmatpush1.xpose.msra.mxu0 0.0
        %254 = vmatprep.subr.mxu0 0.0
        %255 = vmatpush1.xpose.msra.mxu0 0.0
        %256 = vmatprep.subr.mxu0 0.0
        %257 = vmatpush1.xpose.msra.mxu0 0.0
        %258 = vmatprep.subr.mxu0 0.0
        %259 = vmatpush1.xpose.msra.mxu0 0.0
        %260 = vmatprep.subr.mxu0 0.0
        %261 = vmatpush1.xpose.msra.mxu0 0.0
        %262 = vmatprep.subr.mxu0 0.0
        %263 = vmatpush1.xpose.msra.mxu0 0.0
        %264 = vmatprep.subr.mxu0 0.0
        %265 = vmatpush1.xpose.msra.mxu0 0.0
        %266 = vmatprep.subr.mxu0 0.0
        %267 = vmatpush1.xpose.msra.mxu0 0.0
        %268 = vmatprep.subr.mxu0 0.0
        %269 = vmatpush1.xpose.msra.mxu0 0.0
        %270 = vmatprep.subr.mxu0 0.0
        %271 = vmatpush1.xpose.msra.mxu0 0.0
        %272 = vmatprep.subr.mxu0 0.0
        %273 = vmatpush1.xpose.msra.mxu0 0.0
        %274 = vmatprep.subr.mxu0 0.0
        %275 = vmatpush1.xpose.msra.mxu0 0.0
        %276 = vmatprep.subr.mxu0 0.0
        %277 = vmatpush1.xpose.msra.mxu0 0.0
        %278 = vmatprep.subr.mxu0 0.0
        %279 = vmatpush1.xpose.msra.mxu0 %v246
        %280 = vmatprep.subr.mxu0 0.0
        %281 = vmatpush2.xpose.msra.mxu0 0.0
        %282 = vmatprep.subr.mxu0 0.0
        %283 = vmatpush2.xpose.msra.mxu0 0.0
        %284 = vmatprep.subr.mxu0 0.0
        %285 = vmatpush2.xpose.msra.mxu0 0.0
        %286 = vmatprep.subr.mxu0 0.0
        %287 = vmatpush2.xpose.msra.mxu0 0.0
        %288 = vmatprep.subr.mxu0 0.0
        %289 = vmatpush2.xpose.msra.mxu0 0.0
        %290 = vmatprep.subr.mxu0 0.0
        %291 = vmatpush2.xpose.msra.mxu0 0.0
        %292 = vmatprep.subr.mxu0 0.0
        %293 = vmatpush2.xpose.msra.mxu0 0.0
        %294 = vmatprep.subr.mxu0 0.0
        %295 = vmatpush2.xpose.msra.mxu0 0.0
        %296 = vmatprep.subr.mxu0 0.0
        %297 = vmatpush2.xpose.msra.mxu0 0.0
        %298 = vmatprep.subr.mxu0 0.0
        %299 = vmatpush2.xpose.msra.mxu0 0.0
        %300 = vmatprep.subr.mxu0 0.0
        %301 = vmatpush2.xpose.msra.mxu0 0.0
        %302 = vmatprep.subr.mxu0 0.0
        %303 = vmatpush2.xpose.msra.mxu0 0.0
        %304 = vmatprep.subr.mxu0 0.0
        %305 = vmatpush2.xpose.msra.mxu0 0.0
        %306 = vmatprep.subr.mxu0 0.0
        %307 = vmatpush2.xpose.msra.mxu0 0.0
        %308 = vmatprep.subr.mxu0 0.0
        %309 = vmatpush2.xpose.msra.mxu0 0.0
        %310 = vmatprep.subr.mxu0 0.0
        %311 = vmatpush2.xpose.msra.mxu0 0.0
        %312 = vmatprep.mubr.f32.mxu0 0.0
        %313 = vmatmul.mubr.f32.gmra.mxu0 %v169
        %v314 = vpop.f32.mrf.mxu0
        %v315 = vadd.f32 0.0, %v314
        %v316 = vpop.f32.mrf.mxu0
        %317 = vdwg.mxu0
        %v318 = vmul.f32 %v241, 0.03125
        %v319 = vmul.f32 %v315, 0.03125
        %v320 = vmul.f32 %v318, %v318
        %v321 = vsub.f32 %v319, %v320
        %v322 = vmax.f32 %v321, 0.0
        %v323 = vadd.f32 %v322, 1e-05
        %v324 = vrsqrt.pop %v323
        %v326 = vrot.slane %v324, 4
        %v328 = vmul.f32 %v241, %v326
        %v329 = vrot.slane %v324, 3
        %v331 = vmul.f32 %v241, %v329
        %v332 = vrot.slane %v324, 2
        %v334 = vmul.f32 %v241, %v332
        %v335 = vrot.slane %v324, 1
        %v337 = vmul.f32 %v241, %v335
        %v338 = vlaneseq
        %v339 = vand.u32 %v338, 127
        %vm340 = vcmp.eq.s32.totalorder %v339, 0
        %342 = vrot.lane.b32.xlu0 %v328, 121
        %v343 = vpop.permute.xlu0 %342
        %345 = vrot.lane.b32.xlu0 %v328, 1
        %v346 = vpop.permute.xlu0 %345
        %vm348 = vcmask 7168
        %v349 = vsel %vm348, %v343, %v346
        %v350 = vsel %vm340, 0.0, %v349
        %vm351 = vcmp.eq.s32.totalorder %v339, 7
        %353 = vrot.lane.b32.xlu0 %v334, 127
        %v354 = vpop.permute.xlu0 %353
        %356 = vrot.lane.b32.xlu0 %v334, 7
        %v357 = vpop.permute.xlu0 %356
        %vm359 = vcmask 56320
        %v360 = vsel %vm359, %v354, %v357
        %v361 = vsel %vm351, 0.0, %v360
        %vm362 = vcmask 60419
        %v363 = vsel %vm362, %v337, 0.0
        %364 = vadd.xlane.f32.xlu0 %v363
        %v365 = vpop.xlane.xlu0 %364
        %v366 = vmul.f32 %v365, 0.125
        %v368 = vrot.slane %v331, 1
        %v370 = vadd.f32 %v350, %v368
        %v372 = vrot.slane %v361, 2
        %v374 = vadd.f32 %v370, %v372
        %v376 = vrot.slane %v366, 3
        %v378 = vadd.f32 %v374, %v376
        %v379 = vld [vmem:[%s2] sm:$0x1]
        %v380 = vadd.f32 %v378, %v379
        %v381 = vxor.u32 %v380, 2147483648
        %v382 = vmul.f32 %v381, 1.442695
        %v383 = vpow.pop %v382
        %v384 = vadd.f32 %v383, 1.0
        %v385 = vrcp.pop %v384
        %v386 = vmul.f32 1.0, %v385
        %vm387 = vcmask 57344
        %388 = vst.msk [vmem:[%s160] sm:$0x1] %vm387, %v386
        %s389 = sand.u32 %s93, 1
        %s390 = scalar_lea.sflag [#allocation3], %s389
        %s391 = sand.u32 %s93, 1
        %s392 = scalar_lea.vmem [#allocation2], %s391
        // Predicated region
        $region33: #{act_linear_halting_forward.1} parent=31 // pred_check
          %p393 = pneg %p103
        $region34: #{act_linear_halting_forward.1} parent=31 // pred_check_branch
          %395 = sbr.rel (%p393) target = $region36
        $region35: #{act_linear_halting_forward.1} parent=31 // pred_region
          %s397 = ssub.s32 16, 16
          %398 = vsyncadd %s390, %s397
          %s399 = smul.addr %s17, 16
          %s400 = scalar_lea.hbm %s3, %s399
          %s402 = sshll.u32 %s392, 4
          %s403 = int_to_ptr.vmem [resolvable:$true] %s402
          %405 = dma.vmem_to_hbm [thread:$0]  %s403, 16, %s400, %s390
        $region36: #{act_linear_halting_forward.1} parent=31 // pred_fallthru
          _
      $region32: #{act_linear_halting_forward.1} parent=5 // pred_fallthru
        _
      %p406 = scmp.le.s32.totalorder 2, %s12
      // Predicated region
      $region37: #{act_linear_halting_forward.1} parent=5 // pred_check
        %p407 = pneg %p406
      $region38: #{act_linear_halting_forward.1} parent=5 // pred_check_branch
        %409 = sbr.rel (%p407) target = $region40
      $region39: #{act_linear_halting_forward.1} parent=5 // pred_region
        %s410 = ssub.s32 %s12, 2
        // Predicated region
        $region41: #{act_linear_halting_forward.1} parent=39 // pred_check
          %p411 = pneg %p109
        $region42: #{act_linear_halting_forward.1} parent=39 // pred_check_branch
          %413 = sbr.rel (%p411) target = $region44
        $region43: #{act_linear_halting_forward.1} parent=39 // pred_region
          %s414 = sand.u32 %s94, 1
          %s415 = scalar_lea.sflag [#allocation3], %s414
          %s416 = sand.u32 %s94, 1
          %s417 = scalar_lea.vmem [#allocation2], %s416
          %418 = dma.done %s415, 16
        $region44: #{act_linear_halting_forward.1} parent=39 // pred_fallthru
          _
      $region40: #{act_linear_halting_forward.1} parent=5 // pred_fallthru
        _
    $region6: #{act_linear_halting_forward.1} parent=1 // loop_footer
      %s16 = sadd.s32 1, %s12
    $region7: #{act_linear_halting_forward.1} parent=1 // loop_footer_branch
      %11 = sbr.rel target = $region3
    $region8: #{act_linear_halting_forward.1} parent=1 // loop_exit
      _
    %419 = vsyncpa [#allocation3], 1
    %s420 = scalar_lea.sflag [#allocation3], 1
    %421 = vsyncpa %s420, 1

</llo_original>
